<compile_context>
chip_gen: v7x
topology: tpu7x:2x2x1
jax: 0.10.0
libtpu: 0.0.40
codegen_flags: <defaults>
</compile_context>

<pallas_src>
import functools

import jax
import jax.numpy as jnp
from jax.experimental import pallas as pl
from jax.experimental.pallas import tpu as pltpu


# ---------------------------------------------------------------------------
# Parameter / buffer setup (plain JAX) -- mirrors PositionalEncoding.__init__
# ---------------------------------------------------------------------------
def make_positional_encoding_table(max_length: int, embed_dim: int) -> jnp.ndarray:
    """Build the (1, max_length, embed_dim) sin/cos table deterministically."""
    assert embed_dim % 2 == 0
    i = jnp.arange(max_length, dtype=jnp.float32)[:, None]                    # (L, 1)
    exponents = jnp.power(
        10000.0, -jnp.arange(0, embed_dim, 2, dtype=jnp.float32) / embed_dim  # (D/2,)
    )
    pe = jnp.zeros((max_length, embed_dim), jnp.float32)
    pe = pe.at[:, 0::2].set(jnp.sin(i * exponents))
    pe = pe.at[:, 1::2].set(jnp.cos(i * exponents))
    return pe[None]                                                           # (1, L, D)


# ---------------------------------------------------------------------------
# Pallas kernel: elementwise add of the PE row + (optional) inverted dropout
# ---------------------------------------------------------------------------
def pe_dropout_kernel(seed_ref, x_ref, pe_ref, o_ref, *,
                      row_len, dropout_p, training, batch_axis):
    # x_ref / o_ref blocks: (TILE_N, TILE_C);  pe_ref block: (1, TILE_C)
    y = x_ref[...] + pe_ref[...]                                  # broadcast over rows

    if not (training and dropout_p > 0.0):
        o_ref[...] = y
        return

    if dropout_p >= 1.0:
        # p == 1.0: everything is dropped (avoids 1/(1-p) = inf).
        o_ref[...] = jnp.zeros_like(y)
        return

    tn, tc = y.shape
    col_axis = 1 - batch_axis
    n_base = (pl.program_id(batch_axis) * tn).astype(jnp.uint32)
    c_base = (pl.program_id(col_axis) * tc).astype(jnp.uint32)

    # Counter-based hash PRNG: unique 32-bit counter per *global* element, so the
    # mask is identical regardless of how the grid is tiled.
    row = jax.lax.broadcasted_iota(jnp.int32, (tn, tc), 0).astype(jnp.uint32)
    col = jax.lax.broadcasted_iota(jnp.int32, (tn, tc), 1).astype(jnp.uint32)
    flat = (n_base + row) * jnp.uint32(row_len) + (c_base + col)

    seed_u = seed_ref[0].astype(jnp.uint32)
    # Trimmed fmix32-style mixer (pure VPU int ops, ~12 ops/elem -> free under DMA).
    h = flat * jnp.uint32(0x9E3779B1) + (seed_u ^ jnp.uint32(0x7F4A7C15))
    h = h ^ (h >> 16)
    h = h * jnp.uint32(0x85EBCA6B)
    h = h ^ (h >> 13)
    h = h * jnp.uint32(0xC2B2AE35)

    # Top 24 bits -> uniform int in [0, 2^24); signed compare (no unsigned cmp).
    bits = (h >> 8).astype(jnp.int32)
    thresh = jnp.int32(min(int(dropout_p * float(1 << 24)), (1 << 24) - 1))
    keep = bits >= thresh                                         # P(keep) = 1 - p

    # Scale in f32, cast once at the store (avoids bf16 scale-quantization bias).
    scale = jnp.float32(1.0 / (1.0 - dropout_p))
    y32 = y.astype(jnp.float32) * scale
    o_ref[...] = jnp.where(keep, y32, jnp.float32(0.0)).astype(o_ref.dtype)


# ---------------------------------------------------------------------------
# Tile selection
# ---------------------------------------------------------------------------
def _block_target_bytes():
    """Generation-aware block target: ~2 MiB on v5e/unknown, ~4 MiB on v6e/v7x."""
    try:
        kind = jax.devices()[0].device_kind.lower()
    except Exception:
        return 2 << 20
    if "v6" in kind or "v7" in kind:
        return 4 << 20
    return 2 << 20


def _pick_tiles(N, C, itemsize, target_bytes):
    """Pick (tile_n, tile_c) for the flattened (N, C) layout."""
    granule = max(8, 32 // max(1, itemsize))   # sublane granule: 8 f32 / 16 bf16 / 32 int8
    min_rows = min(N, granule)

    # Column (lane) tile: multiple of 128, or the full row when small / not 128-aligned.
    if C % 128 != 0 or C * itemsize * min_rows <= target_bytes:
        tile_c = C
    else:
        tile_c = (target_bytes // (min_rows * 128 * itemsize)) * 128
        tile_c = min(C, max(128, tile_c))

    # Row (sublane) tile: fold batch rows into the block, rounded to the granule.
    rows = max(1, target_bytes // max(1, tile_c * itemsize))
    if rows >= N:
        tile_n = N
    else:
        tile_n = max(granule, (rows // granule) * granule)
        tile_n = min(tile_n, N)
        if tile_n != N and tile_n % granule != 0:
            tile_n = N
    return tile_n, tile_c


# ---------------------------------------------------------------------------
# Wrapper (forward pass)
# ---------------------------------------------------------------------------
def positional_encoding_forward(x, pe_table, *, dropout_p=0.1, training=False, seed=0):
    N, S, D = x.shape
    L = pe_table.shape[-2]
    assert S <= L, "sequence length exceeds the positional-encoding table length"

    # Slice the S rows once (tiny vs. x), cast to x.dtype, flatten to a lane-dense row.
    pe_flat = pe_table.reshape(L, D)[:S].astype(x.dtype).reshape(1, S * D)
    x_flat = x.reshape(N, S * D)
    C = S * D

    itemsize = jnp.dtype(x.dtype).itemsize
    tile_n, tile_c = _pick_tiles(N, C, itemsize, _block_target_bytes())

    num_c = pl.cdiv(C, tile_c)
    num_n = pl.cdiv(N, tile_n)

    if num_c == 1:
        # PE block index is constant anyway; lead with the (larger) batch axis
        # so v7x megacore sharding stays balanced.
        grid = (num_n, 1)
        batch_axis = 0
        x_map = lambda n, c, seed: (n, c)
        pe_map = lambda n, c, seed: (0, 0)
    else:
        # Batch axis innermost -> PE block index (0, c) is constant across the
        # inner loop, so Pallas keeps the PE tile resident (no per-step re-DMA).
        grid = (num_c, num_n)
        batch_axis = 1
        x_map = lambda c, n, seed: (n, c)
        pe_map = lambda c, n, seed: (0, c)

    kernel = functools.partial(
        pe_dropout_kernel,
        row_len=int(C),
        dropout_p=float(dropout_p),
        training=bool(training),
        batch_axis=batch_axis,
    )

    # Live VMEM estimate: x + out double-buffered, pe double-buffered.
    block_bytes = tile_n * tile_c * itemsize
    est_live = 4 * block_bytes + 2 * tile_c * itemsize
    cp_kwargs = {"dimension_semantics": ("parallel", "parallel")}
    if est_live > (14 << 20):  # only in rare non-128-aligned, large-row configs
        cp_kwargs["vmem_limit_bytes"] = int(min(est_live + (8 << 20), 60 << 20))

    seed_arr = jnp.array([seed], dtype=jnp.int32)

    out_flat = pl.pallas_call(
        kernel,
        out_shape=jax.ShapeDtypeStruct((N, C), x.dtype),
        grid_spec=pltpu.PrefetchScalarGridSpec(
            num_scalar_prefetch=1,                 # seed lands in SMEM
            grid=grid,
            in_specs=[
                pl.BlockSpec((tile_n, tile_c), x_map),   # x  (flattened)
                pl.BlockSpec((1, tile_c), pe_map),       # pe (resident over batch)
            ],
            out_specs=pl.BlockSpec((tile_n, tile_c), x_map),
        ),
        compiler_params=pltpu.CompilerParams(**cp_kwargs),
    )(seed_arr, x_flat, pe_flat)

    return out_flat.reshape(N, S, D)


if __name__ == "__main__":
    # Small shapes consistent with the module's forward: x is (N, S, D).
    N, S, D = 2, 8, 32
    MAX_LENGTH = 64

    key = jax.random.PRNGKey(0)
    x = jax.random.normal(key, (N, S, D), dtype=jnp.float32)
    pe_table = make_positional_encoding_table(MAX_LENGTH, D)
    ref = x + pe_table[:, :S]

    # --- eval mode (dropout is identity): exact check against x + pe[:, :S] ---
    out_eval = positional_encoding_forward(x, pe_table, dropout_p=0.1, training=False)
    out_eval = jax.block_until_ready(out_eval)
    assert out_eval.shape == (N, S, D)
    assert jnp.allclose(out_eval, ref, atol=1e-6), "eval-mode mismatch vs reference"

    # --- training mode: exercises the in-kernel dropout path ---
    p = 0.1
    out_train = positional_encoding_forward(
        x, pe_table, dropout_p=p, training=True, seed=1234
    )
    out_train = jax.block_until_ready(out_train)
    assert out_train.shape == (N, S, D)
    # Dropped positions are exactly zero; kept positions are ref / (1 - p).
    kept = out_train != 0.0
    assert jnp.allclose(
        jnp.where(kept, out_train, 0.0),
        jnp.where(kept, ref / (1.0 - p), 0.0),
        atol=1e-5,
        rtol=1e-5,
    ), "training-mode kept values not scaled correctly"
    drop_frac = float(1.0 - jnp.mean(kept.astype(jnp.float32)))
    assert 0.0 < drop_frac < 0.4, f"implausible drop fraction {drop_frac} for p={p}"

    print("KERNEL_OK")
</pallas_src>

<mosaic_0001>
module attributes {stable_mosaic.version = 11 : i64} {
  func.func @pe_dropout_kernel(%arg0: i32, %arg1: i32, %arg2: memref<1xi32, #tpu.memory_space<smem>>, %arg3: memref<2x256xf32, #tpu.memory_space<vmem>>, %arg4: memref<1x256xf32, #tpu.memory_space<vmem>>, %arg5: memref<2x256xf32, #tpu.memory_space<vmem>>) attributes {dimension_semantics = [#tpu.dimension_semantics<parallel>, #tpu.dimension_semantics<parallel>], iteration_bounds = array<i64: 1, 1>, scalar_prefetch = 1 : i64, scratch_operands = 0 : i64, tpu.core_type = #tpu.core_type<tc>, window_params = [{transform_indices = @transform_0, window_bounds = array<i64: 2, 256>}, {pipeline_mode = #tpu.pipeline_mode<synchronous>, transform_indices = @transform_1, window_bounds = array<i64: 1, 256>}, {transform_indices = @transform_2, window_bounds = array<i64: 2, 256>}]} {
    %c0 = arith.constant 0 : index
    %c0_0 = arith.constant 0 : index
    %0 = vector.load %arg3[%c0, %c0_0] : memref<2x256xf32, #tpu.memory_space<vmem>>, vector<2x256xf32>
    %c0_1 = arith.constant 0 : index
    %c0_2 = arith.constant 0 : index
    %1 = vector.load %arg4[%c0_1, %c0_2] : memref<1x256xf32, #tpu.memory_space<vmem>>, vector<1x256xf32>
    %2 = vector.broadcast %1 : vector<1x256xf32> to vector<2x256xf32>
    %3 = arith.addf %0, %2 : vector<2x256xf32>
    %c0_3 = arith.constant 0 : index
    %c0_4 = arith.constant 0 : index
    %4 = vector.load %arg5[%c0_3, %c0_4] : memref<2x256xf32, #tpu.memory_space<vmem>>, vector<2x256xf32>
    tpu.vector_store %arg5[%c0_3, %c0_4], %3 {strides = array<i32>} : memref<2x256xf32, #tpu.memory_space<vmem>>, vector<2x256xf32>,
    return
  }
  func.func @transform_0(%arg0: i32, %arg1: i32, %arg2: memref<1xi32, #tpu.memory_space<smem>>) -> (i32, i32) {
    %c0_i32 = arith.constant 0 : i32
    return %arg0, %arg1 : i32, i32
  }
  func.func @transform_1(%arg0: i32, %arg1: i32, %arg2: memref<1xi32, #tpu.memory_space<smem>>) -> (i32, i32) {
    %c0_i32 = arith.constant 0 : i32
    %c0_i32_0 = arith.constant 0 : i32
    %c0_i32_1 = arith.constant 0 : i32
    return %c0_i32, %c0_i32_0 : i32, i32
  }
  func.func @transform_2(%arg0: i32, %arg1: i32, %arg2: memref<1xi32, #tpu.memory_space<smem>>) -> (i32, i32) {
    %c0_i32 = arith.constant 0 : i32
    return %arg0, %arg1 : i32, i32
  }
}

</mosaic_0001>

<llo_original>
// kernel: tpu_custom_call.1
$region0: #{tpu_custom_call.1}
  #allocation0 [shape = 'u32[]', space=smem, size = 0x4, offset = 0x4, fixed_abs, tag = 'smem constant byte address 0x4 - core index']
  #allocation1 [shape = 'u32[144,128]{1,0:T(1,128)}', space=vmem, size = 0x12000, scoped, tag = 'internal scratch']
  #allocation2 [shape = 's32[1]{0}', space=sflag, size = 0x4, scoped, tag = 'scoped memory for tpu_custom_call.1']
  #allocation3 [shape = 's32[1]{0:T(128)S(6)}', space=smem, size = 0x200, scoped, tag = 'prefetched SMEM operand 0']
  %s0 = inlined_call_operand.<no memory space> [shape: s32[1], index: 0, kind: input, shape index: {}]
  %s1 = inlined_call_operand.hbm [shape: f32[2,256], index: 1, kind: input, shape index: {}]
  %s2 = inlined_call_operand.vmem [shape: f32[1,256], index: 2, kind: input, shape index: {}]
  %s3 = inlined_call_operand.hbm [shape: f32[2,256], index: 3, kind: output, shape index: {}]
  %s4 = sld [smem:[#allocation0]]
  $region22: #{tpu_custom_call.1} parent=0
    _
  %s6 = ssub.s32 1, %s4
  %s7 = scalar_select 0, %s6, %s4
  %8 = sst [smem:[#allocation3]] %s0
  $region1: #{tpu_custom_call.1} parent=0
    #allocation4 [shape = 'u8[2048]{0}', space=vmem, size = 0x800, scoped, tag = 'input window, operand 1, single buffered']
    #allocation5 [shape = 's32[1]{0}', space=sflag, size = 0x4, scoped, tag = 'scoped memory for tpu_custom_call.1']
    #allocation6 [shape = 's32[1]{0}', space=sflag, size = 0x4, scoped, tag = 'scoped memory for tpu_custom_call.1']
    #allocation7 [shape = 'u8[2048]{0}', space=vmem, size = 0x800, scoped, tag = 'output window, operand 0, single buffered']
    %9 = vsyncpa [#allocation5], 0
    %10 = vsyncpa [#allocation6], 0
    // Predicated region
    $region2: #{tpu_custom_call.1} parent=1 // pred_check
      _
    $region3: #{tpu_custom_call.1} parent=1 // pred_check_branch
      %12 = sbr.rel (0) target = $region5
    $region4: #{tpu_custom_call.1} parent=1 // pred_region
      %s14 = ssub.s32 64, 64
      %15 = vsyncadd [#allocation5], %s14
      %s17 = sshll.u32 [#allocation4], 4
      %s18 = int_to_ptr.vmem [resolvable:$true] %s17
      %20 = dma.hbm_to_vmem [thread:$0]  %s1, 64, %s18, [#allocation5]
    $region5: #{tpu_custom_call.1} parent=1 // pred_fallthru
      _
    // Predicated region
    $region6: #{tpu_custom_call.1} parent=1 // pred_check
      _
    $region7: #{tpu_custom_call.1} parent=1 // pred_check_branch
      %22 = sbr.rel (0) target = $region9
    $region8: #{tpu_custom_call.1} parent=1 // pred_region
      _
    $region9: #{tpu_custom_call.1} parent=1 // pred_fallthru
      _
    // Predicated region
    $region10: #{tpu_custom_call.1} parent=1 // pred_check
      _
    $region11: #{tpu_custom_call.1} parent=1 // pred_check_branch
      %24 = sbr.rel (0) target = $region13
    $region12: #{tpu_custom_call.1} parent=1 // pred_region
      %25 = dma.done [#allocation5], 64
    $region13: #{tpu_custom_call.1} parent=1 // pred_fallthru
      _
    %v26 = vld [vmem:[#allocation4] sm:$0xf]
    %v27 = vld [vmem:[%s2] sm:$0x3]
    %v29 = vlaneseq
    %v30 = vshrl.u32 %v29, 7
    %v31 = vsub.s32 0, %v30
    %v32 = vrot.slane %v27, %v31
    %v33 = vlaneseq
    %v34 = vshrl.u32 %v33, 7
    %v35 = vsub.s32 1, %v34
    %v36 = vrot.slane %v27, %v35
    %v37 = vcombine.low %v32, %v36
    %v39 = vunpack.c.l.s4 1983009808
    %v40 = vunpack.c.0.s8 %v39
    %v41 = vlaneseq
    %v42 = vshrl.u32 %v41, 7
    %v43 = vsub.s32 %v40, %v42
    %v44 = vrot.slane %v37, %v43
    %v46 = vadd.f32 %v26, %v44
    %47 = vst [vmem:[#allocation7] sm:$0xf] %v46
    // Predicated region
    $region14: #{tpu_custom_call.1} parent=1 // pred_check
      _
    $region15: #{tpu_custom_call.1} parent=1 // pred_check_branch
      %49 = sbr.rel (0) target = $region17
    $region16: #{tpu_custom_call.1} parent=1 // pred_region
      %s51 = ssub.s32 64, 64
      %52 = vsyncadd [#allocation6], %s51
      %s54 = sshll.u32 [#allocation7], 4
      %s55 = int_to_ptr.vmem [resolvable:$true] %s54
      %57 = dma.vmem_to_hbm [thread:$0]  %s55, 64, %s3, [#allocation6]
    $region17: #{tpu_custom_call.1} parent=1 // pred_fallthru
      _
    // Predicated region
    $region18: #{tpu_custom_call.1} parent=1 // pred_check
      _
    $region19: #{tpu_custom_call.1} parent=1 // pred_check_branch
      %59 = sbr.rel (0) target = $region21
    $region20: #{tpu_custom_call.1} parent=1 // pred_region
      %60 = dma.done [#allocation6], 64
    $region21: #{tpu_custom_call.1} parent=1 // pred_fallthru
      _
    %61 = vsyncpa [#allocation5], 1
    %62 = vsyncpa [#allocation6], 1

</llo_original>
